<compile_context>
chip_gen: v7x
topology: tpu7x:2x2x1
jax: 0.10.0
libtpu: 0.0.40
codegen_flags: <defaults>
</compile_context>

<pallas_src>
import functools

import numpy as np
import jax
import jax.numpy as jnp
from jax.experimental import pallas as pl
from jax.experimental.pallas import tpu as pltpu


# ----------------------------------------------------------------------------
# helpers
# ----------------------------------------------------------------------------
def _round_up(x, m):
    return ((x + m - 1) // m) * m


def _pick_spatial_tile(s):
    """Pick a lane tile (multiple of 128, <=512) that divides s; prefer >=2
    grid blocks so both v7x TensorCores get work.  Returns (tile, padded_s)."""
    for t in (512, 384, 256, 128):
        if s % t == 0 and s // t >= 2:
            return t, s
    for t in (512, 384, 256, 128):
        if s % t == 0:
            return t, s
    sp = _round_up(s, 128)      # rare fallback: pad spatial dim to 128 multiple
    return 128, sp


# ----------------------------------------------------------------------------
# Pallas kernels
# ----------------------------------------------------------------------------
def _conv_gemm_kernel(w_ref, x_ref, b_ref, o_ref, *, relu):
    # Single dot: K is one full-extent block (no K grid axis, no accumulator).
    acc = jnp.dot(w_ref[...], x_ref[...], preferred_element_type=jnp.float32)
    acc = acc + b_ref[...]
    if relu:
        acc = jnp.maximum(acc, 0.0)
    o_ref[...] = acc.astype(o_ref.dtype)


def _up_conv_head_kernel(wu_ref, x_ref, bu_ref, wh_ref, bh_ref, o_ref):
    # upsampling 3x3 conv (+bias+ReLU) with the 1x1 head conv fused as an
    # epilogue matmul while the feature tile is still in VMEM.
    feat = jnp.dot(wu_ref[...], x_ref[...], preferred_element_type=jnp.float32)
    feat = jnp.maximum(feat + bu_ref[...], 0.0)
    out = jnp.dot(wh_ref[...], feat.astype(wh_ref.dtype),
                  preferred_element_type=jnp.float32)
    o_ref[...] = (out + bh_ref[...]).astype(o_ref.dtype)


_CPARAMS = pltpu.CompilerParams(
    dimension_semantics=("parallel",),
    vmem_limit_bytes=32 * 1024 * 1024,
)


def conv_gemm(w_mat, bias_col, patches_t, *, relu, out_dtype):
    """w_mat: (Cout, Kp) bf16, bias_col: (Cout, 1) f32, patches_t: (Kp, S) bf16."""
    cout, kp = w_mat.shape
    kp2, s = patches_t.shape
    assert kp == kp2
    tn, sp = _pick_spatial_tile(s)
    if sp != s:
        patches_t = jnp.pad(patches_t, ((0, 0), (0, sp - s)))
    out = pl.pallas_call(
        functools.partial(_conv_gemm_kernel, relu=relu),
        out_shape=jax.ShapeDtypeStruct((cout, sp), out_dtype),
        grid_spec=pltpu.PrefetchScalarGridSpec(
            num_scalar_prefetch=0,
            grid=(sp // tn,),
            in_specs=[
                pl.BlockSpec((cout, kp), lambda j: (0, 0)),   # weight: resident
                pl.BlockSpec((kp, tn), lambda j: (0, j)),     # patch tile
                pl.BlockSpec((cout, 1), lambda j: (0, 0)),    # bias: resident
            ],
            out_specs=pl.BlockSpec((cout, tn), lambda j: (0, j)),
        ),
        compiler_params=_CPARAMS,
    )(w_mat, patches_t, bias_col)
    return out if sp == s else out[:, :s]


def up_conv_head(wu_mat, bu_col, wh_mat, bh_col, patches_t, *, out_dtype=jnp.float32):
    """Fused (upsample-conv + ReLU) -> 1x1 head conv.  Lane-dense output."""
    f, kp = wu_mat.shape
    kp2, s = patches_t.shape
    nk, f2 = wh_mat.shape
    assert kp == kp2 and f == f2
    tn, sp = _pick_spatial_tile(s)
    if sp != s:
        patches_t = jnp.pad(patches_t, ((0, 0), (0, sp - s)))
    out = pl.pallas_call(
        _up_conv_head_kernel,
        out_shape=jax.ShapeDtypeStruct((nk, sp), out_dtype),
        grid_spec=pltpu.PrefetchScalarGridSpec(
            num_scalar_prefetch=0,
            grid=(sp // tn,),
            in_specs=[
                pl.BlockSpec((f, kp), lambda j: (0, 0)),      # up-conv weight
                pl.BlockSpec((kp, tn), lambda j: (0, j)),     # patch tile
                pl.BlockSpec((f, 1), lambda j: (0, 0)),       # up-conv bias
                pl.BlockSpec((nk, f), lambda j: (0, 0)),      # head weight
                pl.BlockSpec((nk, 1), lambda j: (0, 0)),      # head bias
            ],
            out_specs=pl.BlockSpec((nk, tn), lambda j: (0, j)),
        ),
        compiler_params=_CPARAMS,
    )(wu_mat, patches_t, bu_col, wh_mat, bh_col)
    return out if sp == s else out[:, :s]


# ----------------------------------------------------------------------------
# Plain-JAX glue: transposed im2col (channels-first layout, no per-layer
# transposes), with K padded to a MXU-friendly multiple while it is built.
# ----------------------------------------------------------------------------
def _im2col_t(x_cnhw, kh, kw, *, stride, pad, k_pad=None):
    """x: (C, N, H, W) -> patches^T (k_pad, N*Ho*Wo); K order = (kh, kw, C)."""
    c, n, h, w = x_cnhw.shape
    ho = (h + 2 * pad - kh) // stride + 1
    wo = (w + 2 * pad - kw) // stride + 1
    s = n * ho * wo
    xp = jnp.pad(x_cnhw, ((0, 0), (0, 0), (pad, pad), (pad, pad)))
    pieces = []
    for i in range(kh):
        for j in range(kw):
            sl = xp[:, :, i: i + stride * ho: stride, j: j + stride * wo: stride]
            pieces.append(sl.reshape(c, s))
    k = kh * kw * c
    if k_pad is not None and k_pad > k:
        pieces.append(jnp.zeros((k_pad - k, s), x_cnhw.dtype))
    return jnp.concatenate(pieces, axis=0), (n, ho, wo)


def _im2col_t_upsample2x(x_cnhw, *, k_pad=None):
    """patches^T of a 3x3/stride-1/pad-1 conv applied to nearest-2x-upsample(x),
    indexed directly from x (no 4x upsampled tensor is materialized)."""
    c, n, h, w = x_cnhw.shape
    ho, wo = 2 * h, 2 * w
    s = n * ho * wo
    xp = jnp.pad(x_cnhw, ((0, 0), (0, 0), (1, 1), (1, 1)))  # zero conv-padding
    oh = jnp.arange(ho)
    ow = jnp.arange(wo)
    pieces = []
    for ki in range(3):
        for kj in range(3):
            # upsampled-padded index u = o + k - 1 maps to xp index u//2 + 1
            # (u = -1 -> row 0 = zero pad, u = 2H -> row H+1 = zero pad).
            hidx = (oh + (ki - 1)) // 2 + 1
            widx = (ow + (kj - 1)) // 2 + 1
            sl = jnp.take(jnp.take(xp, hidx, axis=2), widx, axis=3)
            pieces.append(sl.reshape(c, s))
    k = 9 * c
    if k_pad is not None and k_pad > k:
        pieces.append(jnp.zeros((k_pad - k, s), x_cnhw.dtype))
    return jnp.concatenate(pieces, axis=0), (n, ho, wo)


def _weight_to_mat(w_oihw, k_pad):
    """(Cout, Cin, kh, kw) -> (Cout, k_pad) bf16, columns ordered (kh, kw, Cin)."""
    cout, cin, kh, kw = w_oihw.shape
    m = jnp.transpose(w_oihw, (0, 2, 3, 1)).reshape(cout, kh * kw * cin)
    if k_pad > kh * kw * cin:
        m = jnp.pad(m, ((0, 0), (0, k_pad - kh * kw * cin)))
    return m.astype(jnp.bfloat16)


# ----------------------------------------------------------------------------
# PoseResNet
# ----------------------------------------------------------------------------
def init_pose_resnet_params(key, in_channels, feature_dim, num_keypoints):
    k_bb, k_up, k_head = jax.random.split(key, 3)
    return {
        # backbone: 3x3 stride-2 conv
        "bb_w": 0.05 * jax.random.normal(k_bb, (feature_dim, in_channels, 3, 3), jnp.float32),
        "bb_b": jnp.zeros((feature_dim,), jnp.float32),
        # upsampling: nearest 2x + 3x3 conv
        "up_w": 0.05 * jax.random.normal(k_up, (feature_dim, feature_dim, 3, 3), jnp.float32),
        "up_b": jnp.zeros((feature_dim,), jnp.float32),
        # head: 1x1 conv, nn.init.normal_(std=0.001), bias = 0
        "head_w": 0.001 * jax.random.normal(k_head, (num_keypoints, feature_dim, 1, 1), jnp.float32),
        "head_b": jnp.zeros((num_keypoints,), jnp.float32),
    }


@jax.jit
def pose_resnet_forward(params, x_nchw):
    feature_dim = params["bb_b"].shape[0]
    num_keypoints = params["head_b"].shape[0]

    # Single boundary transpose NCHW -> CNHW (channels on GEMM sublanes,
    # flattened spatial on lanes); bf16 for MXU inputs / halved HBM traffic.
    x = jnp.transpose(x_nchw, (1, 0, 2, 3)).astype(jnp.bfloat16)
    cin = x.shape[0]

    # ---- backbone: 3x3 / stride-2 / pad-1 conv + ReLU (Pallas GEMM) --------
    k1 = _round_up(9 * cin, 16)
    w1 = _weight_to_mat(params["bb_w"], k1)
    b1 = params["bb_b"].astype(jnp.float32).reshape(-1, 1)
    p1, (n, h1, wsp1) = _im2col_t(x, 3, 3, stride=2, pad=1, k_pad=k1)
    y1 = conv_gemm(w1, b1, p1, relu=True, out_dtype=jnp.bfloat16)
    y1 = y1.reshape(feature_dim, n, h1, wsp1)        # CNHW, no transpose

    # ---- upsampling (nearest 2x folded into indexing) + 3x3 conv + ReLU,
    #      fused with the 1x1 head conv in one Pallas kernel -----------------
    k2 = _round_up(9 * feature_dim, 16)
    w2 = _weight_to_mat(params["up_w"], k2)
    b2 = params["up_b"].astype(jnp.float32).reshape(-1, 1)
    wh = params["head_w"].reshape(num_keypoints, feature_dim).astype(jnp.bfloat16)
    bh = params["head_b"].astype(jnp.float32).reshape(-1, 1)
    p2, (n2, h2, wsp2) = _im2col_t_upsample2x(y1, k_pad=k2)
    z = up_conv_head(w2, b2, wh, bh, p2, out_dtype=jnp.float32)
    z = z.reshape(num_keypoints, n2, h2, wsp2)

    # boundary transpose back to NCHW (PyTorch convention)
    return jnp.transpose(z, (1, 0, 2, 3))


# ----------------------------------------------------------------------------
# pure-JAX (XLA conv) reference for a numerical sanity check
# ----------------------------------------------------------------------------
def _reference_forward(params, x):
    dn = ("NCHW", "OIHW", "NCHW")
    y = jax.lax.conv_general_dilated(x, params["bb_w"], (2, 2), ((1, 1), (1, 1)),
                                     dimension_numbers=dn)
    y = jax.nn.relu(y + params["bb_b"][None, :, None, None])
    y = jnp.repeat(jnp.repeat(y, 2, axis=2), 2, axis=3)
    y = jax.lax.conv_general_dilated(y, params["up_w"], (1, 1), ((1, 1), (1, 1)),
                                     dimension_numbers=dn)
    y = jax.nn.relu(y + params["up_b"][None, :, None, None])
    y = jax.lax.conv_general_dilated(y, params["head_w"], (1, 1), ((0, 0), (0, 0)),
                                     dimension_numbers=dn)
    return y + params["head_b"][None, :, None, None]


if __name__ == "__main__":
    key = jax.random.PRNGKey(0)
    k_param, k_in = jax.random.split(key)

    batch, in_channels, spatial = 2, 4, 16
    feature_dim, num_keypoints = 32, 16

    params = init_pose_resnet_params(k_param, in_channels, feature_dim, num_keypoints)
    x = jax.random.normal(k_in, (batch, in_channels, spatial, spatial), jnp.float32)

    out = pose_resnet_forward(params, x)
    jax.block_until_ready(out)

    assert out.shape == (batch, num_keypoints, spatial, spatial), out.shape
    assert out.dtype == jnp.float32

    # numerical sanity check vs. pure-JAX reference (bf16 MXU inputs -> loose tol)
    ref = _reference_forward(params, x)
    np.testing.assert_allclose(np.asarray(out), np.asarray(ref), rtol=3e-2, atol=5e-4)

    print("KERNEL_OK")
</pallas_src>

<mosaic_0001>
module attributes {stable_mosaic.version = 11 : i64} {
  func.func @_conv_gemm_kernel(%arg0: i32, %arg1: memref<32x48xbf16, #tpu.memory_space<vmem>>, %arg2: memref<48x128xbf16, #tpu.memory_space<vmem>>, %arg3: memref<32x1xf32, #tpu.memory_space<vmem>>, %arg4: memref<32x128xbf16, #tpu.memory_space<vmem>>) attributes {dimension_semantics = [#tpu.dimension_semantics<parallel>], iteration_bounds = array<i64: 1>, scalar_prefetch = 0 : i64, scratch_operands = 0 : i64, tpu.core_type = #tpu.core_type<tc>, window_params = [{pipeline_mode = #tpu.pipeline_mode<synchronous>, transform_indices = @transform_0, window_bounds = array<i64: 32, 48>}, {transform_indices = @transform_1, window_bounds = array<i64: 48, 128>}, {pipeline_mode = #tpu.pipeline_mode<synchronous>, transform_indices = @transform_2, window_bounds = array<i64: 32, 1>}, {transform_indices = @transform_3, window_bounds = array<i64: 32, 128>}]} {
    %c0 = arith.constant 0 : index
    %c0_0 = arith.constant 0 : index
    %0 = vector.load %arg1[%c0, %c0_0] : memref<32x48xbf16, #tpu.memory_space<vmem>>, vector<32x48xbf16>
    %c0_1 = arith.constant 0 : index
    %c0_2 = arith.constant 0 : index
    %1 = vector.load %arg2[%c0_1, %c0_2] : memref<48x128xbf16, #tpu.memory_space<vmem>>, vector<48x128xbf16>
    %cst = arith.constant dense<0.000000e+00> : vector<32x128xf32>
    %2 = tpu.matmul %0, %1, %cst {dimension_numbers = #tpu.dot_dimension_numbers<[1], [0], [0], [1], [0, 0, 1, 1], [], []>} : vector<32x48xbf16>, vector<48x128xbf16>, vector<32x128xf32> -> vector<32x128xf32>
    %c0_3 = arith.constant 0 : index
    %c0_4 = arith.constant 0 : index
    %3 = vector.load %arg3[%c0_3, %c0_4] : memref<32x1xf32, #tpu.memory_space<vmem>>, vector<32x1xf32>
    %4 = vector.broadcast %3 : vector<32x1xf32> to vector<32x128xf32>
    %5 = arith.addf %2, %4 : vector<32x128xf32>
    %cst_5 = arith.constant 0.000000e+00 : f32
    %6 = vector.broadcast %cst_5 : f32 to vector<32x128xf32>
    %7 = arith.maximumf %5, %6 : vector<32x128xf32>
    %8 = arith.truncf %7 : vector<32x128xf32> to vector<32x128xbf16>
    %c0_6 = arith.constant 0 : index
    %c0_7 = arith.constant 0 : index
    %9 = vector.load %arg4[%c0_6, %c0_7] : memref<32x128xbf16, #tpu.memory_space<vmem>>, vector<32x128xbf16>
    tpu.vector_store %arg4[%c0_6, %c0_7], %8 {strides = array<i32>} : memref<32x128xbf16, #tpu.memory_space<vmem>>, vector<32x128xbf16>,
    return
  }
  func.func @transform_0(%arg0: i32) -> (i32, i32) {
    %c0_i32 = arith.constant 0 : i32
    %c0_i32_0 = arith.constant 0 : i32
    %c0_i32_1 = arith.constant 0 : i32
    return %c0_i32, %c0_i32_0 : i32, i32
  }
  func.func @transform_1(%arg0: i32) -> (i32, i32) {
    %c0_i32 = arith.constant 0 : i32
    %c0_i32_0 = arith.constant 0 : i32
    return %c0_i32, %arg0 : i32, i32
  }
  func.func @transform_2(%arg0: i32) -> (i32, i32) {
    %c0_i32 = arith.constant 0 : i32
    %c0_i32_0 = arith.constant 0 : i32
    %c0_i32_1 = arith.constant 0 : i32
    return %c0_i32, %c0_i32_0 : i32, i32
  }
  func.func @transform_3(%arg0: i32) -> (i32, i32) {
    %c0_i32 = arith.constant 0 : i32
    %c0_i32_0 = arith.constant 0 : i32
    return %c0_i32, %arg0 : i32, i32
  }
}

module attributes {stable_mosaic.version = 11 : i64} {
  func.func @_up_conv_head_kernel(%arg0: i32, %arg1: memref<32x288xbf16, #tpu.memory_space<vmem>>, %arg2: memref<288x256xbf16, #tpu.memory_space<vmem>>, %arg3: memref<32x1xf32, #tpu.memory_space<vmem>>, %arg4: memref<16x32xbf16, #tpu.memory_space<vmem>>, %arg5: memref<16x1xf32, #tpu.memory_space<vmem>>, %arg6: memref<16x256xf32, #tpu.memory_space<vmem>>) attributes {dimension_semantics = [#tpu.dimension_semantics<parallel>], iteration_bounds = array<i64: 2>, scalar_prefetch = 0 : i64, scratch_operands = 0 : i64, tpu.core_type = #tpu.core_type<tc>, window_params = [{pipeline_mode = #tpu.pipeline_mode<synchronous>, transform_indices = @transform_0, window_bounds = array<i64: 32, 288>}, {transform_indices = @transform_1, window_bounds = array<i64: 288, 256>}, {pipeline_mode = #tpu.pipeline_mode<synchronous>, transform_indices = @transform_2, window_bounds = array<i64: 32, 1>}, {pipeline_mode = #tpu.pipeline_mode<synchronous>, transform_indices = @transform_3, window_bounds = array<i64: 16, 32>}, {pipeline_mode = #tpu.pipeline_mode<synchronous>, transform_indices = @transform_4, window_bounds = array<i64: 16, 1>}, {transform_indices = @transform_5, window_bounds = array<i64: 16, 256>}]} {
    %c0 = arith.constant 0 : index
    %c0_0 = arith.constant 0 : index
    %0 = vector.load %arg1[%c0, %c0_0] : memref<32x288xbf16, #tpu.memory_space<vmem>>, vector<32x288xbf16>
    %c0_1 = arith.constant 0 : index
    %c0_2 = arith.constant 0 : index
    %1 = vector.load %arg2[%c0_1, %c0_2] : memref<288x256xbf16, #tpu.memory_space<vmem>>, vector<288x256xbf16>
    %cst = arith.constant dense<0.000000e+00> : vector<32x256xf32>
    %2 = tpu.matmul %0, %1, %cst {dimension_numbers = #tpu.dot_dimension_numbers<[1], [0], [0], [1], [0, 0, 1, 1], [], []>} : vector<32x288xbf16>, vector<288x256xbf16>, vector<32x256xf32> -> vector<32x256xf32>
    %c0_3 = arith.constant 0 : index
    %c0_4 = arith.constant 0 : index
    %3 = vector.load %arg3[%c0_3, %c0_4] : memref<32x1xf32, #tpu.memory_space<vmem>>, vector<32x1xf32>
    %4 = vector.broadcast %3 : vector<32x1xf32> to vector<32x256xf32>
    %5 = arith.addf %2, %4 : vector<32x256xf32>
    %cst_5 = arith.constant 0.000000e+00 : f32
    %6 = vector.broadcast %cst_5 : f32 to vector<32x256xf32>
    %7 = arith.maximumf %5, %6 : vector<32x256xf32>
    %c0_6 = arith.constant 0 : index
    %c0_7 = arith.constant 0 : index
    %8 = vector.load %arg4[%c0_6, %c0_7] : memref<16x32xbf16, #tpu.memory_space<vmem>>, vector<16x32xbf16>
    %9 = arith.truncf %7 : vector<32x256xf32> to vector<32x256xbf16>
    %cst_8 = arith.constant dense<0.000000e+00> : vector<16x256xf32>
    %10 = tpu.matmul %8, %9, %cst_8 {dimension_numbers = #tpu.dot_dimension_numbers<[1], [0], [0], [1], [0, 0, 1, 1], [], []>} : vector<16x32xbf16>, vector<32x256xbf16>, vector<16x256xf32> -> vector<16x256xf32>
    %c0_9 = arith.constant 0 : index
    %c0_10 = arith.constant 0 : index
    %11 = vector.load %arg5[%c0_9, %c0_10] : memref<16x1xf32, #tpu.memory_space<vmem>>, vector<16x1xf32>
    %12 = vector.broadcast %11 : vector<16x1xf32> to vector<16x256xf32>
    %13 = arith.addf %10, %12 : vector<16x256xf32>
    %c0_11 = arith.constant 0 : index
    %c0_12 = arith.constant 0 : index
    %14 = vector.load %arg6[%c0_11, %c0_12] : memref<16x256xf32, #tpu.memory_space<vmem>>, vector<16x256xf32>
    tpu.vector_store %arg6[%c0_11, %c0_12], %13 {strides = array<i32>} : memref<16x256xf32, #tpu.memory_space<vmem>>, vector<16x256xf32>,
    return
  }
  func.func @transform_0(%arg0: i32) -> (i32, i32) {
    %c0_i32 = arith.constant 0 : i32
    %c0_i32_0 = arith.constant 0 : i32
    %c0_i32_1 = arith.constant 0 : i32
    return %c0_i32, %c0_i32_0 : i32, i32
  }
  func.func @transform_1(%arg0: i32) -> (i32, i32) {
    %c0_i32 = arith.constant 0 : i32
    %c0_i32_0 = arith.constant 0 : i32
    return %c0_i32, %arg0 : i32, i32
  }
  func.func @transform_2(%arg0: i32) -> (i32, i32) {
    %c0_i32 = arith.constant 0 : i32
    %c0_i32_0 = arith.constant 0 : i32
    %c0_i32_1 = arith.constant 0 : i32
    return %c0_i32, %c0_i32_0 : i32, i32
  }
  func.func @transform_3(%arg0: i32) -> (i32, i32) {
    %c0_i32 = arith.constant 0 : i32
    %c0_i32_0 = arith.constant 0 : i32
    %c0_i32_1 = arith.constant 0 : i32
    return %c0_i32, %c0_i32_0 : i32, i32
  }
  func.func @transform_4(%arg0: i32) -> (i32, i32) {
    %c0_i32 = arith.constant 0 : i32
    %c0_i32_0 = arith.constant 0 : i32
    %c0_i32_1 = arith.constant 0 : i32
    return %c0_i32, %c0_i32_0 : i32, i32
  }
  func.func @transform_5(%arg0: i32) -> (i32, i32) {
    %c0_i32 = arith.constant 0 : i32
    %c0_i32_0 = arith.constant 0 : i32
    return %c0_i32, %arg0 : i32, i32
  }
}

</mosaic_0001>

<llo_original>
// kernel: pose_resnet_forward.2
$region0: #{pose_resnet_forward.2}
  #allocation0 [shape = 'u32[]', space=smem, size = 0x4, offset = 0x4, fixed_abs, tag = 'smem constant byte address 0x4 - core index']
  #allocation1 [shape = 'u32[144,128]{1,0:T(1,128)}', space=vmem, size = 0x12000, scoped, tag = 'internal scratch']
  %s0 = inlined_call_operand.vmem [shape: bf16[32,48], index: 0, kind: input, shape index: {}]
  %s1 = inlined_call_operand.vmem [shape: bf16[48,128], index: 1, kind: input, shape index: {}]
  %s2 = inlined_call_operand.vmem [shape: f32[32,1], index: 2, kind: input, shape index: {}]
  %s3 = inlined_call_operand.vmem [shape: bf16[32,128], index: 3, kind: output, shape index: {}]
  %s4 = sld [smem:[#allocation0]]
  $region22: #{pose_resnet_forward.2} parent=0
    _
  %s6 = ssub.s32 1, %s4
  %s7 = scalar_select 0, %s6, %s4
  // Predicated region
  $region2: #{pose_resnet_forward.2} parent=0 // pred_check
    _
  $region3: #{pose_resnet_forward.2} parent=0 // pred_check_branch
    %9 = sbr.rel (0) target = $region5
  $region4: #{pose_resnet_forward.2} parent=0 // pred_region
    _
  $region5: #{pose_resnet_forward.2} parent=0 // pred_fallthru
    _
  // Predicated region
  $region6: #{pose_resnet_forward.2} parent=0 // pred_check
    _
  $region7: #{pose_resnet_forward.2} parent=0 // pred_check_branch
    %11 = sbr.rel (0) target = $region9
  $region8: #{pose_resnet_forward.2} parent=0 // pred_region
    _
  $region9: #{pose_resnet_forward.2} parent=0 // pred_fallthru
    _
  // Predicated region
  $region10: #{pose_resnet_forward.2} parent=0 // pred_check
    _
  $region11: #{pose_resnet_forward.2} parent=0 // pred_check_branch
    %13 = sbr.rel (0) target = $region13
  $region12: #{pose_resnet_forward.2} parent=0 // pred_region
    _
  $region13: #{pose_resnet_forward.2} parent=0 // pred_fallthru
    _
  %v15 = vld [vmem:[%s0] sm:$0xf]
  %v16 = vld [vmem:[%s0 + $0x4] sm:$0xf]
  %v17 = vld [vmem:[%s0 + $0x8] sm:$0xf]
  %v18 = vld [vmem:[%s0 + $0xc] sm:$0xf]
  %v19 = vld [vmem:[%s1] sm:$0xf]
  %v20 = vld [vmem:[%s1 + $0x4] sm:$0xf]
  %v21 = vld [vmem:[%s1 + $0x8] sm:$0xf]
  %v22 = vld [vmem:[%s1 + $0xc] sm:$0xf]
  %v23 = vld [vmem:[%s1 + $0x10] sm:$0xf]
  %v24 = vld [vmem:[%s1 + $0x14] sm:$0xf]
  %v25 = vld [vmem:[%s2] sm:$0xff]
  %v26 = vld [vmem:[%s2 + $0x8] sm:$0xff]
  %v27 = vld [vmem:[%s2 + $0x10] sm:$0xff]
  %v28 = vld [vmem:[%s2 + $0x18] sm:$0xff]
  %30 = vset.pattern.permute.xlu0 0
  %31 = vperm.xlu0 %30, %v25
  %v32 = vpop.permute.xlu0 %31
  %35 = vset.pattern.permute.xlu0 0
  %36 = vperm.xlu0 %35, %v26
  %v37 = vpop.permute.xlu0 %36
  %40 = vset.pattern.permute.xlu0 0
  %41 = vperm.xlu0 %40, %v27
  %v42 = vpop.permute.xlu0 %41
  %45 = vset.pattern.permute.xlu0 0
  %46 = vperm.xlu0 %45, %v28
  %v47 = vpop.permute.xlu0 %46
  %v53 = vunpack.c.l.b16 %v15
  %v54 = vunpack.c.l.b16 %v16
  %v55 = vunpack.c.l.b16 %v17
  %v56 = vunpack.c.l.b16 %v18
  %v57 = vpack.c.b16 %v54, %v53
  %v58 = vpack.c.b16 %v56, %v55
  %v65 = vunpack.c.l.b16 %v19
  %v66 = vunpack.c.l.b16 %v20
  %v67 = vunpack.c.l.b16 %v21
  %v68 = vunpack.c.l.b16 %v22
  %v69 = vunpack.c.l.b16 %v23
  %v70 = vunpack.c.l.b16 %v24
  %v71 = vpack.c.b16 %v66, %v65
  %v72 = vpack.c.b16 %v68, %v67
  %v73 = vpack.c.b16 %v70, %v69
  %vm77 = vcmask 392192
  %v79 = vsel %vm77, %v57, 0
  %v82 = vsel %vm77, %v58, 0
  %84 = vmatprep.subr.bf16.mxu0 0
  %85 = vmatpush1.bf16.msra.mxu0 %v71
  %86 = vmatprep.subr.bf16.mxu0 0
  %87 = vmatpush1.bf16.msra.mxu0 %v72
  %88 = vmatprep.subr.bf16.mxu0 0
  %89 = vmatpush1.bf16.msra.mxu0 %v73
  %90 = vmatprep.subr.bf16.mxu0 0
  %91 = vmatpush1.bf16.msra.mxu0 0
  %92 = vmatprep.subr.bf16.mxu0 0
  %93 = vmatpush1.bf16.msra.mxu0 0
  %94 = vmatprep.subr.bf16.mxu0 0
  %95 = vmatpush1.bf16.msra.mxu0 0
  %96 = vmatprep.subr.bf16.mxu0 0
  %97 = vmatpush1.bf16.msra.mxu0 0
  %98 = vmatprep.subr.bf16.mxu0 0
  %99 = vmatpush1.bf16.msra.mxu0 0
  %100 = vmatprep.subr.bf16.mxu0 0
  %101 = vmatpush1.bf16.msra.mxu0 0
  %102 = vmatprep.subr.bf16.mxu0 0
  %103 = vmatpush1.bf16.msra.mxu0 0
  %104 = vmatprep.subr.bf16.mxu0 0
  %105 = vmatpush1.bf16.msra.mxu0 0
  %106 = vmatprep.subr.bf16.mxu0 0
  %107 = vmatpush1.bf16.msra.mxu0 0
  %108 = vmatprep.subr.bf16.mxu0 0
  %109 = vmatpush1.bf16.msra.mxu0 0
  %110 = vmatprep.subr.bf16.mxu0 0
  %111 = vmatpush1.bf16.msra.mxu0 0
  %112 = vmatprep.subr.bf16.mxu0 0
  %113 = vmatpush1.bf16.msra.mxu0 0
  %114 = vmatprep.subr.bf16.mxu0 0
  %115 = vmatpush1.bf16.msra.mxu0 0
  %116 = vmatprep.mubr.bf16.mxu0 0
  %117 = vmatmul.mubr.bf16.gmra.mrb[0].mxu0 %v79
  %v118 = vpop.f32.mrb[0].mxu0
  %v119 = vadd.f32 %v32, %v118
  %v120 = vpop.f32.mrb[0].mxu0
  %v121 = vpop.f32.mrb[0].mxu0
  %v122 = vadd.f32 %v37, %v121
  %v123 = vpop.f32.mrb[0].mxu0
  %124 = vmatprep.mubr.bf16.mxu0 0
  %125 = vmatmul.mubr.bf16.gmra.mrb[0].mxu0 %v82
  %v126 = vpop.f32.mrb[0].mxu0
  %v127 = vadd.f32 %v42, %v126
  %v128 = vpop.f32.mrb[0].mxu0
  %v129 = vpop.f32.mrb[0].mxu0
  %v130 = vadd.f32 %v47, %v129
  %v131 = vpop.f32.mrb[0].mxu0
  %132 = vdwg.mxu0
  %v133 = vmax.f32 %v119, 0.0
  %v134 = vmax.f32 %v122, 0.0
  %v135 = vmax.f32 %v127, 0.0
  %v136 = vmax.f32 %v130, 0.0
  %v137 = vpack.c.bf16 %v134, %v133
  %v138 = vpack.c.bf16 %v136, %v135
  %v141 = vunpack.c.l.b16 %v137
  %v142 = vunpack.c.h.b16 %v137
  %v143 = vunpack.c.l.b16 %v138
  %v144 = vunpack.c.h.b16 %v138
  %v145 = vpack.c.b16 %v141, %v141
  %v146 = vpack.c.b16 %v142, %v142
  %v147 = vpack.c.b16 %v143, %v143
  %v148 = vpack.c.b16 %v144, %v144
  %153 = vst [vmem:[%s3] sm:$0xf] %v145
  %154 = vst [vmem:[%s3 + $0x4] sm:$0xf] %v146
  %155 = vst [vmem:[%s3 + $0x8] sm:$0xf] %v147
  %156 = vst [vmem:[%s3 + $0xc] sm:$0xf] %v148
  // Predicated region
  $region14: #{pose_resnet_forward.2} parent=0 // pred_check
    _
  $region15: #{pose_resnet_forward.2} parent=0 // pred_check_branch
    %158 = sbr.rel (0) target = $region17
  $region16: #{pose_resnet_forward.2} parent=0 // pred_region
    _
  $region17: #{pose_resnet_forward.2} parent=0 // pred_fallthru
    _
  // Predicated region
  $region18: #{pose_resnet_forward.2} parent=0 // pred_check
    _
  $region19: #{pose_resnet_forward.2} parent=0 // pred_check_branch
    %160 = sbr.rel (0) target = $region21
  $region20: #{pose_resnet_forward.2} parent=0 // pred_region
    _
  $region21: #{pose_resnet_forward.2} parent=0 // pred_fallthru
    _

// kernel: pose_resnet_forward.3
$region0: #{pose_resnet_forward.3}
  #allocation0 [shape = 'u32[]', space=smem, size = 0x4, offset = 0x4, fixed_abs, tag = 'smem constant byte address 0x4 - core index']
  #allocation1 [shape = 'u32[144,128]{1,0:T(1,128)}', space=vmem, size = 0x12000, scoped, tag = 'internal scratch']
  %s0 = inlined_call_operand.vmem [shape: bf16[32,288], index: 0, kind: input, shape index: {}]
  %s1 = inlined_call_operand.vmem [shape: bf16[288,512], index: 1, kind: input, shape index: {}]
  %s2 = inlined_call_operand.vmem [shape: f32[32,1], index: 2, kind: input, shape index: {}]
  %s3 = inlined_call_operand.vmem [shape: bf16[16,32], index: 3, kind: input, shape index: {}]
  %s4 = inlined_call_operand.vmem [shape: f32[16,1], index: 4, kind: input, shape index: {}]
  %s5 = inlined_call_operand.vmem [shape: f32[16,512], index: 5, kind: output, shape index: {}]
  %s6 = sld [smem:[#allocation0]]
  $region110: #{pose_resnet_forward.3} parent=0
    _
  %s8 = ssub.s32 1, %s6
  %s9 = scalar_select 0, %s8, %s6
  $region1: #{pose_resnet_forward.3} parent=0
    #allocation2 [shape = 'u8[294912]{0}', space=vmem, size = 0x48000, scoped, tag = 'input window, operand 1']
    #allocation3 [shape = 'u8[32768]{0}', space=vmem, size = 0x8000, scoped, tag = 'output window, operand 0']
    loop: start=0, step=1, limit=4
    $region2: #{pose_resnet_forward.3} parent=1 // loop_pre_header
      _
    $region3: #{pose_resnet_forward.3} parent=1 // loop_header
      %s11 = sphi 0, %s15
      %p12 = scmp.ge.s32.totalorder %s11, 4
      %s19 = sphi 0, %s19
      %s21 = sphi 0, %s19
      %s22 = sphi 0, %s21
      %s36 = sphi 0, %s22
      %s42 = sphi 0, %s44
      %s45 = sphi 0, %s42
      %s46 = sphi 0, %s45
      %s62 = sphi 0, %s46
      %s66 = sphi 0, %s66
      %s68 = sphi 0, %s66
      %s69 = sphi 0, %s68
      %s83 = sphi 0, %s69
      %s87 = sphi 0, %s87
      %s89 = sphi 0, %s87
      %s90 = sphi 0, %s89
      %s104 = sphi 0, %s90
      %s108 = sphi 0, %s108
      %s110 = sphi 0, %s108
      %s111 = sphi 0, %s110
      %s125 = sphi 0, %s111
      %s131 = sphi 0, %s133
      %s134 = sphi 0, %s131
      %s135 = sphi 0, %s134
      %s151 = sphi 0, %s135
    $region4: #{pose_resnet_forward.3} parent=1 // loop_header_branch
      %14 = sbr.rel (%p12) target = $region8
    $region5: #{pose_resnet_forward.3} parent=1 // loop_body
      %s16 = ssub.s32 %s11, 1
      %s17 = ssub.s32 %s11, 2
      %s18 = sadd.s32 %s11, 1
      %s20 = sadd.s32 %s19, 1
      %p23 = scmp.eq.s32.totalorder %s11, 1
      %p24 = scmp.ne.s32.totalorder %s19, %s21
      %p25 = scmp.eq.s32.totalorder %s11, 0
      %p26 = por %p24, %p25
      %p27 = scmp.ne.s32.totalorder %s19, %s21
      %p28 = scmp.eq.s32.totalorder %s16, 1
      %p29 = por %p27, %p28
      %p30 = scmp.ne.s32.totalorder %s21, %s22
      %p31 = scmp.eq.s32.totalorder %s16, 0
      %p32 = por %p30, %p31
      %p33 = scmp.ne.s32.totalorder %s21, %s22
      %p34 = scmp.eq.s32.totalorder %s17, 1
      %p35 = por %p33, %p34
      %p37 = scmp.ne.s32.totalorder %s22, %s36
      %p38 = scmp.eq.s32.totalorder %s17, 0
      %p39 = por %p37, %p38
      %s40 = ssub.s32 %s11, %s18
      %p41 = scmp.eq.s32.totalorder %s40, 0
      %s43 = sadd.s32 %s42, 1
      %s44 = scalar_select %p41, %s42, %s43
      %p47 = pneg %p41
      %p48 = scmp.eq.s32.totalorder %s11, 1
      %p49 = por %p47, %p48
      %p50 = scmp.ne.s32.totalorder %s42, %s45
      %p51 = scmp.eq.s32.totalorder %s11, 0
      %p52 = por %p50, %p51
      %p53 = scmp.ne.s32.totalorder %s42, %s45
      %p54 = scmp.eq.s32.totalorder %s16, 1
      %p55 = por %p53, %p54
      %p56 = scmp.ne.s32.totalorder %s45, %s46
      %p57 = scmp.eq.s32.totalorder %s16, 0
      %p58 = por %p56, %p57
      %p59 = scmp.ne.s32.totalorder %s45, %s46
      %p60 = scmp.eq.s32.totalorder %s17, 1
      %p61 = por %p59, %p60
      %p63 = scmp.ne.s32.totalorder %s46, %s62
      %p64 = scmp.eq.s32.totalorder %s17, 0
      %p65 = por %p63, %p64
      %s67 = sadd.s32 %s66, 1
      %p70 = scmp.eq.s32.totalorder %s11, 1
      %p71 = scmp.ne.s32.totalorder %s66, %s68
      %p72 = scmp.eq.s32.totalorder %s11, 0
      %p73 = por %p71, %p72
      %p74 = scmp.ne.s32.totalorder %s66, %s68
      %p75 = scmp.eq.s32.totalorder %s16, 1
      %p76 = por %p74, %p75
      %p77 = scmp.ne.s32.totalorder %s68, %s69
      %p78 = scmp.eq.s32.totalorder %s16, 0
      %p79 = por %p77, %p78
      %p80 = scmp.ne.s32.totalorder %s68, %s69
      %p81 = scmp.eq.s32.totalorder %s17, 1
      %p82 = por %p80, %p81
      %p84 = scmp.ne.s32.totalorder %s69, %s83
      %p85 = scmp.eq.s32.totalorder %s17, 0
      %p86 = por %p84, %p85
      %s88 = sadd.s32 %s87, 1
      %p91 = scmp.eq.s32.totalorder %s11, 1
      %p92 = scmp.ne.s32.totalorder %s87, %s89
      %p93 = scmp.eq.s32.totalorder %s11, 0
      %p94 = por %p92, %p93
      %p95 = scmp.ne.s32.totalorder %s87, %s89
      %p96 = scmp.eq.s32.totalorder %s16, 1
      %p97 = por %p95, %p96
      %p98 = scmp.ne.s32.totalorder %s89, %s90
      %p99 = scmp.eq.s32.totalorder %s16, 0
      %p100 = por %p98, %p99
      %p101 = scmp.ne.s32.totalorder %s89, %s90
      %p102 = scmp.eq.s32.totalorder %s17, 1
      %p103 = por %p101, %p102
      %p105 = scmp.ne.s32.totalorder %s90, %s104
      %p106 = scmp.eq.s32.totalorder %s17, 0
      %p107 = por %p105, %p106
      %s109 = sadd.s32 %s108, 1
      %p112 = scmp.eq.s32.totalorder %s11, 1
      %p113 = scmp.ne.s32.totalorder %s108, %s110
      %p114 = scmp.eq.s32.totalorder %s11, 0
      %p115 = por %p113, %p114
      %p116 = scmp.ne.s32.totalorder %s108, %s110
      %p117 = scmp.eq.s32.totalorder %s16, 1
      %p118 = por %p116, %p117
      %p119 = scmp.ne.s32.totalorder %s110, %s111
      %p120 = scmp.eq.s32.totalorder %s16, 0
      %p121 = por %p119, %p120
      %p122 = scmp.ne.s32.totalorder %s110, %s111
      %p123 = scmp.eq.s32.totalorder %s17, 1
      %p124 = por %p122, %p123
      %p126 = scmp.ne.s32.totalorder %s111, %s125
      %p127 = scmp.eq.s32.totalorder %s17, 0
      %p128 = por %p126, %p127
      %s129 = ssub.s32 %s11, %s18
      %p130 = scmp.eq.s32.totalorder %s129, 0
      %s132 = sadd.s32 %s131, 1
      %s133 = scalar_select %p130, %s131, %s132
      %p136 = pneg %p130
      %p137 = scmp.eq.s32.totalorder %s11, 1
      %p138 = por %p136, %p137
      %p139 = scmp.ne.s32.totalorder %s131, %s134
      %p140 = scmp.eq.s32.totalorder %s11, 0
      %p141 = por %p139, %p140
      %p142 = scmp.ne.s32.totalorder %s131, %s134
      %p143 = scmp.eq.s32.totalorder %s16, 1
      %p144 = por %p142, %p143
      %p145 = scmp.ne.s32.totalorder %s134, %s135
      %p146 = scmp.eq.s32.totalorder %s16, 0
      %p147 = por %p145, %p146
      %p148 = scmp.ne.s32.totalorder %s134, %s135
      %p149 = scmp.eq.s32.totalorder %s17, 1
      %p150 = por %p148, %p149
      %p152 = scmp.ne.s32.totalorder %s135, %s151
      %p153 = scmp.eq.s32.totalorder %s17, 0
      %p154 = por %p152, %p153
      %p155 = scmp.le.s32.totalorder 1, %s11
      %p156 = scmp.lt.s32.totalorder %s11, 3
      %p157 = pnand %p155, %p156
      %p158 = pneg %p157
      // Predicated region
      $region9: #{pose_resnet_forward.3} parent=5 // pred_check
        _
      $region10: #{pose_resnet_forward.3} parent=5 // pred_check_branch
        %160 = sbr.rel (%p157) target = $region12
      $region11: #{pose_resnet_forward.3} parent=5 // pred_region
        %s161 = ssub.s32 %s11, 1
        // Predicated region
        $region13: #{pose_resnet_forward.3} parent=11 // pred_check
          %p162 = pneg %p32
        $region14: #{pose_resnet_forward.3} parent=11 // pred_check_branch
          %164 = sbr.rel (%p162) target = $region16
        $region15: #{pose_resnet_forward.3} parent=11 // pred_region
          _
        $region16: #{pose_resnet_forward.3} parent=11 // pred_fallthru
          _
        // Predicated region
        $region17: #{pose_resnet_forward.3} parent=11 // pred_check
          %p165 = pneg %p79
        $region18: #{pose_resnet_forward.3} parent=11 // pred_check_branch
          %167 = sbr.rel (%p165) target = $region20
        $region19: #{pose_resnet_forward.3} parent=11 // pred_region
          _
        $region20: #{pose_resnet_forward.3} parent=11 // pred_fallthru
          _
        // Predicated region
        $region21: #{pose_resnet_forward.3} parent=11 // pred_check
          %p168 = pneg %p100
        $region22: #{pose_resnet_forward.3} parent=11 // pred_check_branch
          %170 = sbr.rel (%p168) target = $region24
        $region23: #{pose_resnet_forward.3} parent=11 // pred_region
          _
        $region24: #{pose_resnet_forward.3} parent=11 // pred_fallthru
          _
        // Predicated region
        $region25: #{pose_resnet_forward.3} parent=11 // pred_check
          %p171 = pneg %p121
        $region26: #{pose_resnet_forward.3} parent=11 // pred_check_branch
          %173 = sbr.rel (%p171) target = $region28
        $region27: #{pose_resnet_forward.3} parent=11 // pred_region
          _
        $region28: #{pose_resnet_forward.3} parent=11 // pred_fallthru
          _
      $region12: #{pose_resnet_forward.3} parent=5 // pred_fallthru
        _
      %p174 = scmp.lt.s32.totalorder %s11, 2
      // Predicated region
      $region29: #{pose_resnet_forward.3} parent=5 // pred_check
        %p175 = pneg %p174
      $region30: #{pose_resnet_forward.3} parent=5 // pred_check_branch
        %177 = sbr.rel (%p175) target = $region32
      $region31: #{pose_resnet_forward.3} parent=5 // pred_region
        // Predicated region
        $region33: #{pose_resnet_forward.3} parent=31 // pred_check
          %p178 = pneg %p52
        $region34: #{pose_resnet_forward.3} parent=31 // pred_check_branch
          %180 = sbr.rel (%p178) target = $region36
        $region35: #{pose_resnet_forward.3} parent=31 // pred_region
          %s181 = sand.u32 %s42, 1
          %s182 = sand.u32 %s42, 1
          %s183 = smul.addr %s182, 288
          %s184 = scalar_lea.vmem [#allocation2], %s183
          %s185 = smul.u32 2, %s11
          %s186 = smul.addr %s185, 4
          %s187 = scalar_lea.vmem %s1, %s186
          // Predicated region
          $region37: #{pose_resnet_forward.3} parent=35 // pred_check
            _
          $region38: #{pose_resnet_forward.3} parent=35 // pred_check_branch
            %189 = sbr.rel (0) target = $region40
          $region39: #{pose_resnet_forward.3} parent=35 // pred_region
            // Predicated region
            $region41: #{pose_resnet_forward.3} parent=39 // pred_check
              _
            $region42: #{pose_resnet_forward.3} parent=39 // pred_check_branch
              %191 = sbr.rel (0) target = $region44
            $region43: #{pose_resnet_forward.3} parent=39 // pred_region
              // Predicated region
              $region56: #{pose_resnet_forward.3} parent=43 // pred_check
                _
              $region57: #{pose_resnet_forward.3} parent=43 // pred_check_branch
                %276 = sbr.rel (0) target = $region59
              $region58: #{pose_resnet_forward.3} parent=43 // pred_region
                loop: start=0, step=1, limit=1
                $region60: #{pose_resnet_forward.3} parent=58 // loop_pre_header
                  _
                $region61: #{pose_resnet_forward.3} parent=58 // loop_header
                  %s278 = sphi 0, %s282
                  %p279 = scmp.ge.s32.totalorder %s278, 1
                  %s283 = sphi %s187, %s187
                  %s284 = sphi %s184, %s184
                $region62: #{pose_resnet_forward.3} parent=58 // loop_header_branch
                  %281 = sbr.rel (%p279) target = $region66
                $region63: #{pose_resnet_forward.3} parent=58 // loop_body
                  %v285 = vld [vmem:[%s283] sm:$0xff]
                  %286 = vst [vmem:[%s284] sm:$0xff] %v285
                  %v287 = vld [vmem:[%s283 + $0x10] sm:$0xff]
                  %288 = vst [vmem:[%s284 + $0x8] sm:$0xff] %v287
                  %v289 = vld [vmem:[%s283 + $0x20] sm:$0xff]
                  %290 = vst [vmem:[%s284 + $0x10] sm:$0xff] %v289
                  %v291 = vld [vmem:[%s283 + $0x30] sm:$0xff]
                  %292 = vst [vmem:[%s284 + $0x18] sm:$0xff] %v291
                  %v293 = vld [vmem:[%s283 + $0x40] sm:$0xff]
                  %294 = vst [vmem:[%s284 + $0x20] sm:$0xff] %v293
                  %v295 = vld [vmem:[%s283 + $0x50] sm:$0xff]
                  %296 = vst [vmem:[%s284 + $0x28] sm:$0xff] %v295
                  %v297 = vld [vmem:[%s283 + $0x60] sm:$0xff]
                  %298 = vst [vmem:[%s284 + $0x30] sm:$0xff] %v297
                  %v299 = vld [vmem:[%s283 + $0x70] sm:$0xff]
                  %300 = vst [vmem:[%s284 + $0x38] sm:$0xff] %v299
                  %v301 = vld [vmem:[%s283 + $0x80] sm:$0xff]
                  %302 = vst [vmem:[%s284 + $0x40] sm:$0xff] %v301
                  %v303 = vld [vmem:[%s283 + $0x90] sm:$0xff]
                  %304 = vst [vmem:[%s284 + $0x48] sm:$0xff] %v303
                  %v305 = vld [vmem:[%s283 + $0xa0] sm:$0xff]
                  %306 = vst [vmem:[%s284 + $0x50] sm:$0xff] %v305
                  %v307 = vld [vmem:[%s283 + $0xb0] sm:$0xff]
                  %308 = vst [vmem:[%s284 + $0x58] sm:$0xff] %v307
                  %v309 = vld [vmem:[%s283 + $0xc0] sm:$0xff]
                  %310 = vst [vmem:[%s284 + $0x60] sm:$0xff] %v309
                  %v311 = vld [vmem:[%s283 + $0xd0] sm:$0xff]
                  %312 = vst [vmem:[%s284 + $0x68] sm:$0xff] %v311
                  %v313 = vld [vmem:[%s283 + $0xe0] sm:$0xff]
                  %314 = vst [vmem:[%s284 + $0x70] sm:$0xff] %v313
                  %v315 = vld [vmem:[%s283 + $0xf0] sm:$0xff]
                  %316 = vst [vmem:[%s284 + $0x78] sm:$0xff] %v315
                  %v317 = vld [vmem:[%s283 + $0x100] sm:$0xff]
                  %318 = vst [vmem:[%s284 + $0x80] sm:$0xff] %v317
                  %v319 = vld [vmem:[%s283 + $0x110] sm:$0xff]
                  %320 = vst [vmem:[%s284 + $0x88] sm:$0xff] %v319
                  %v321 = vld [vmem:[%s283 + $0x120] sm:$0xff]
                  %322 = vst [vmem:[%s284 + $0x90] sm:$0xff] %v321
                  %v323 = vld [vmem:[%s283 + $0x130] sm:$0xff]
                  %324 = vst [vmem:[%s284 + $0x98] sm:$0xff] %v323
                  %v325 = vld [vmem:[%s283 + $0x140] sm:$0xff]
                  %326 = vst [vmem:[%s284 + $0xa0] sm:$0xff] %v325
                  %v327 = vld [vmem:[%s283 + $0x150] sm:$0xff]
                  %328 = vst [vmem:[%s284 + $0xa8] sm:$0xff] %v327
                  %v329 = vld [vmem:[%s283 + $0x160] sm:$0xff]
                  %330 = vst [vmem:[%s284 + $0xb0] sm:$0xff] %v329
                  %v331 = vld [vmem:[%s283 + $0x170] sm:$0xff]
                  %332 = vst [vmem:[%s284 + $0xb8] sm:$0xff] %v331
                  %v333 = vld [vmem:[%s283 + $0x180] sm:$0xff]
                  %334 = vst [vmem:[%s284 + $0xc0] sm:$0xff] %v333
                  %v335 = vld [vmem:[%s283 + $0x190] sm:$0xff]
                  %336 = vst [vmem:[%s284 + $0xc8] sm:$0xff] %v335
                  %v337 = vld [vmem:[%s283 + $0x1a0] sm:$0xff]
                  %338 = vst [vmem:[%s284 + $0xd0] sm:$0xff] %v337
                  %v339 = vld [vmem:[%s283 + $0x1b0] sm:$0xff]
                  %340 = vst [vmem:[%s284 + $0xd8] sm:$0xff] %v339
                  %v341 = vld [vmem:[%s283 + $0x1c0] sm:$0xff]
                  %342 = vst [vmem:[%s284 + $0xe0] sm:$0xff] %v341
                  %v343 = vld [vmem:[%s283 + $0x1d0] sm:$0xff]
                  %344 = vst [vmem:[%s284 + $0xe8] sm:$0xff] %v343
                  %v345 = vld [vmem:[%s283 + $0x1e0] sm:$0xff]
                  %346 = vst [vmem:[%s284 + $0xf0] sm:$0xff] %v345
                  %v347 = vld [vmem:[%s283 + $0x1f0] sm:$0xff]
                  %348 = vst [vmem:[%s284 + $0xf8] sm:$0xff] %v347
                  %v349 = vld [vmem:[%s283 + $0x200] sm:$0xff]
                  %350 = vst [vmem:[%s284 + $0x100] sm:$0xff] %v349
                  %v351 = vld [vmem:[%s283 + $0x210] sm:$0xff]
                  %352 = vst [vmem:[%s284 + $0x108] sm:$0xff] %v351
                  %v353 = vld [vmem:[%s283 + $0x220] sm:$0xff]
                  %354 = vst [vmem:[%s284 + $0x110] sm:$0xff] %v353
                  %v355 = vld [vmem:[%s283 + $0x230] sm:$0xff]
                  %356 = vst [vmem:[%s284 + $0x118] sm:$0xff] %v355
                $region64: #{pose_resnet_forward.3} parent=58 // loop_footer
                  %s282 = sadd.s32 1, %s278
                $region65: #{pose_resnet_forward.3} parent=58 // loop_footer_branch
                  %277 = sbr.rel target = $region61
                $region66: #{pose_resnet_forward.3} parent=58 // loop_exit
                  _
              $region59: #{pose_resnet_forward.3} parent=43 // pred_fallthru
                _
              // Predicated region
              $region67: #{pose_resnet_forward.3} parent=43 // pred_check
                _
              $region68: #{pose_resnet_forward.3} parent=43 // pred_check_branch
                %358 = sbr.rel target = $region70
              $region69: #{pose_resnet_forward.3} parent=43 // pred_region
                _
              $region70: #{pose_resnet_forward.3} parent=43 // pred_fallthru
                _
            $region44: #{pose_resnet_forward.3} parent=39 // pred_fallthru
              _
            // Predicated region
            $region45: #{pose_resnet_forward.3} parent=39 // pred_check
              _
            $region46: #{pose_resnet_forward.3} parent=39 // pred_check_branch
              %193 = sbr.rel target = $region48
            $region47: #{pose_resnet_forward.3} parent=39 // pred_region
              loop: start=0, step=1, limit=1
              $region49: #{pose_resnet_forward.3} parent=47 // loop_pre_header
                _
              $region50: #{pose_resnet_forward.3} parent=47 // loop_header
                %s196 = sphi 0, %s200
                %p197 = scmp.ge.s32.totalorder %s196, 1
                %s201 = sphi %s187, %s187
                %s202 = sphi %s184, %s184
              $region51: #{pose_resnet_forward.3} parent=47 // loop_header_branch
                %199 = sbr.rel (%p197) target = $region55
              $region52: #{pose_resnet_forward.3} parent=47 // loop_body
                %v203 = vld [vmem:[%s201] sm:$0xff]
                %204 = vst [vmem:[%s202] sm:$0xff] %v203
                %v205 = vld [vmem:[%s201 + $0x10] sm:$0xff]
                %206 = vst [vmem:[%s202 + $0x8] sm:$0xff] %v205
                %v207 = vld [vmem:[%s201 + $0x20] sm:$0xff]
                %208 = vst [vmem:[%s202 + $0x10] sm:$0xff] %v207
                %v209 = vld [vmem:[%s201 + $0x30] sm:$0xff]
                %210 = vst [vmem:[%s202 + $0x18] sm:$0xff] %v209
                %v211 = vld [vmem:[%s201 + $0x40] sm:$0xff]
                %212 = vst [vmem:[%s202 + $0x20] sm:$0xff] %v211
                %v213 = vld [vmem:[%s201 + $0x50] sm:$0xff]
                %214 = vst [vmem:[%s202 + $0x28] sm:$0xff] %v213
                %v215 = vld [vmem:[%s201 + $0x60] sm:$0xff]
                %216 = vst [vmem:[%s202 + $0x30] sm:$0xff] %v215
                %v217 = vld [vmem:[%s201 + $0x70] sm:$0xff]
                %218 = vst [vmem:[%s202 + $0x38] sm:$0xff] %v217
                %v219 = vld [vmem:[%s201 + $0x80] sm:$0xff]
                %220 = vst [vmem:[%s202 + $0x40] sm:$0xff] %v219
                %v221 = vld [vmem:[%s201 + $0x90] sm:$0xff]
                %222 = vst [vmem:[%s202 + $0x48] sm:$0xff] %v221
                %v223 = vld [vmem:[%s201 + $0xa0] sm:$0xff]
                %224 = vst [vmem:[%s202 + $0x50] sm:$0xff] %v223
                %v225 = vld [vmem:[%s201 + $0xb0] sm:$0xff]
                %226 = vst [vmem:[%s202 + $0x58] sm:$0xff] %v225
                %v227 = vld [vmem:[%s201 + $0xc0] sm:$0xff]
                %228 = vst [vmem:[%s202 + $0x60] sm:$0xff] %v227
                %v229 = vld [vmem:[%s201 + $0xd0] sm:$0xff]
                %230 = vst [vmem:[%s202 + $0x68] sm:$0xff] %v229
                %v231 = vld [vmem:[%s201 + $0xe0] sm:$0xff]
                %232 = vst [vmem:[%s202 + $0x70] sm:$0xff] %v231
                %v233 = vld [vmem:[%s201 + $0xf0] sm:$0xff]
                %234 = vst [vmem:[%s202 + $0x78] sm:$0xff] %v233
                %v235 = vld [vmem:[%s201 + $0x100] sm:$0xff]
                %236 = vst [vmem:[%s202 + $0x80] sm:$0xff] %v235
                %v237 = vld [vmem:[%s201 + $0x110] sm:$0xff]
                %238 = vst [vmem:[%s202 + $0x88] sm:$0xff] %v237
                %v239 = vld [vmem:[%s201 + $0x120] sm:$0xff]
                %240 = vst [vmem:[%s202 + $0x90] sm:$0xff] %v239
                %v241 = vld [vmem:[%s201 + $0x130] sm:$0xff]
                %242 = vst [vmem:[%s202 + $0x98] sm:$0xff] %v241
                %v243 = vld [vmem:[%s201 + $0x140] sm:$0xff]
                %244 = vst [vmem:[%s202 + $0xa0] sm:$0xff] %v243
                %v245 = vld [vmem:[%s201 + $0x150] sm:$0xff]
                %246 = vst [vmem:[%s202 + $0xa8] sm:$0xff] %v245
                %v247 = vld [vmem:[%s201 + $0x160] sm:$0xff]
                %248 = vst [vmem:[%s202 + $0xb0] sm:$0xff] %v247
                %v249 = vld [vmem:[%s201 + $0x170] sm:$0xff]
                %250 = vst [vmem:[%s202 + $0xb8] sm:$0xff] %v249
                %v251 = vld [vmem:[%s201 + $0x180] sm:$0xff]
                %252 = vst [vmem:[%s202 + $0xc0] sm:$0xff] %v251
                %v253 = vld [vmem:[%s201 + $0x190] sm:$0xff]
                %254 = vst [vmem:[%s202 + $0xc8] sm:$0xff] %v253
                %v255 = vld [vmem:[%s201 + $0x1a0] sm:$0xff]
                %256 = vst [vmem:[%s202 + $0xd0] sm:$0xff] %v255
                %v257 = vld [vmem:[%s201 + $0x1b0] sm:$0xff]
                %258 = vst [vmem:[%s202 + $0xd8] sm:$0xff] %v257
                %v259 = vld [vmem:[%s201 + $0x1c0] sm:$0xff]
                %260 = vst [vmem:[%s202 + $0xe0] sm:$0xff] %v259
                %v261 = vld [vmem:[%s201 + $0x1d0] sm:$0xff]
                %262 = vst [vmem:[%s202 + $0xe8] sm:$0xff] %v261
                %v263 = vld [vmem:[%s201 + $0x1e0] sm:$0xff]
                %264 = vst [vmem:[%s202 + $0xf0] sm:$0xff] %v263
                %v265 = vld [vmem:[%s201 + $0x1f0] sm:$0xff]
                %266 = vst [vmem:[%s202 + $0xf8] sm:$0xff] %v265
                %v267 = vld [vmem:[%s201 + $0x200] sm:$0xff]
                %268 = vst [vmem:[%s202 + $0x100] sm:$0xff] %v267
                %v269 = vld [vmem:[%s201 + $0x210] sm:$0xff]
                %270 = vst [vmem:[%s202 + $0x108] sm:$0xff] %v269
                %v271 = vld [vmem:[%s201 + $0x220] sm:$0xff]
                %272 = vst [vmem:[%s202 + $0x110] sm:$0xff] %v271
                %v273 = vld [vmem:[%s201 + $0x230] sm:$0xff]
                %274 = vst [vmem:[%s202 + $0x118] sm:$0xff] %v273
              $region53: #{pose_resnet_forward.3} parent=47 // loop_footer
                %s200 = sadd.s32 1, %s196
              $region54: #{pose_resnet_forward.3} parent=47 // loop_footer_branch
                %195 = sbr.rel target = $region50
              $region55: #{pose_resnet_forward.3} parent=47 // loop_exit
                _
            $region48: #{pose_resnet_forward.3} parent=39 // pred_fallthru
              _
          $region40: #{pose_resnet_forward.3} parent=35 // pred_fallthru
            _
          %359 = vnop
        $region36: #{pose_resnet_forward.3} parent=31 // pred_fallthru
          _
      $region32: #{pose_resnet_forward.3} parent=5 // pred_fallthru
        _
      %p360 = scmp.le.s32.totalorder 1, %s11
      %p361 = scmp.lt.s32.totalorder %s11, 3
      %p362 = pnand %p360, %p361
      %p363 = pneg %p362
      // Predicated region
      $region71: #{pose_resnet_forward.3} parent=5 // pred_check
        _
      $region72: #{pose_resnet_forward.3} parent=5 // pred_check_branch
        %365 = sbr.rel (%p362) target = $region74
      $region73: #{pose_resnet_forward.3} parent=5 // pred_region
        %s366 = ssub.s32 %s11, 1
        %s367 = sand.u32 %s45, 1
        %s368 = sand.u32 %s45, 1
        %s369 = smul.addr %s368, 288
        %s370 = scalar_lea.vmem [#allocation2], %s369
        // Predicated region
        $region75: #{pose_resnet_forward.3} parent=73 // pred_check
          %p371 = pneg %p58
        $region76: #{pose_resnet_forward.3} parent=73 // pred_check_branch
          %373 = sbr.rel (%p371) target = $region78
        $region77: #{pose_resnet_forward.3} parent=73 // pred_region
          _
        $region78: #{pose_resnet_forward.3} parent=73 // pred_fallthru
          _
        %p374 = pneg %p32
        %p375 = pneg %p29
        %s376 = sand.u32 %s45, 1
        %s377 = sand.u32 %s45, 1
        %s378 = smul.addr %s377, 288
        %s379 = scalar_lea.vmem [#allocation2], %s378
        %p380 = pneg %p58
        %p381 = pneg %p55
        %p382 = pneg %p79
        %p383 = pneg %p76
        %p384 = pneg %p100
        %p385 = pneg %p97
        %p386 = pneg %p121
        %p387 = pneg %p118
        %p388 = pneg %p147
        %p389 = pneg %p144
        %s390 = sand.u32 %s134, 1
        %s391 = sand.u32 %s134, 1
        %s392 = smul.addr %s391, 32
        %s393 = scalar_lea.vmem [#allocation3], %s392
        %s394 = smul.u32 2, %s16
        %s395 = smul.u32 2, %s16
        %v397 = vld [vmem:[%s0] sm:$0xff]
        %v398 = vld [vmem:[%s0 + $0x8] sm:$0xf]
        %v399 = vld [vmem:[%s0 + $0xc] sm:$0xff]
        %v400 = vld [vmem:[%s0 + $0x14] sm:$0xf]
        %v401 = vld [vmem:[%s0 + $0x18] sm:$0xff]
        %v402 = vld [vmem:[%s0 + $0x20] sm:$0xf]
        %v403 = vld [vmem:[%s0 + $0x24] sm:$0xff]
        %v404 = vld [vmem:[%s0 + $0x2c] sm:$0xf]
        %v405 = vld [vmem:[%s370] sm:$0xff]
        %v406 = vld [vmem:[%s370 + $0x8] sm:$0xff]
        %v407 = vld [vmem:[%s370 + $0x10] sm:$0xff]
        %v408 = vld [vmem:[%s370 + $0x18] sm:$0xff]
        %v409 = vld [vmem:[%s370 + $0x20] sm:$0xff]
        %v410 = vld [vmem:[%s370 + $0x28] sm:$0xff]
        %v411 = vld [vmem:[%s370 + $0x30] sm:$0xff]
        %v412 = vld [vmem:[%s370 + $0x38] sm:$0xff]
        %v413 = vld [vmem:[%s370 + $0x40] sm:$0xff]
        %v414 = vld [vmem:[%s370 + $0x48] sm:$0xff]
        %v415 = vld [vmem:[%s370 + $0x50] sm:$0xff]
        %v416 = vld [vmem:[%s370 + $0x58] sm:$0xff]
        %v417 = vld [vmem:[%s370 + $0x60] sm:$0xff]
        %v418 = vld [vmem:[%s370 + $0x68] sm:$0xff]
        %v419 = vld [vmem:[%s370 + $0x70] sm:$0xff]
        %v420 = vld [vmem:[%s370 + $0x78] sm:$0xff]
        %v421 = vld [vmem:[%s370 + $0x80] sm:$0xff]
        %v422 = vld [vmem:[%s370 + $0x88] sm:$0xff]
        %v423 = vld [vmem:[%s370 + $0x90] sm:$0xff]
        %v424 = vld [vmem:[%s370 + $0x98] sm:$0xff]
        %v425 = vld [vmem:[%s370 + $0xa0] sm:$0xff]
        %v426 = vld [vmem:[%s370 + $0xa8] sm:$0xff]
        %v427 = vld [vmem:[%s370 + $0xb0] sm:$0xff]
        %v428 = vld [vmem:[%s370 + $0xb8] sm:$0xff]
        %v429 = vld [vmem:[%s370 + $0xc0] sm:$0xff]
        %v430 = vld [vmem:[%s370 + $0xc8] sm:$0xff]
        %v431 = vld [vmem:[%s370 + $0xd0] sm:$0xff]
        %v432 = vld [vmem:[%s370 + $0xd8] sm:$0xff]
        %v433 = vld [vmem:[%s370 + $0xe0] sm:$0xff]
        %v434 = vld [vmem:[%s370 + $0xe8] sm:$0xff]
        %v435 = vld [vmem:[%s370 + $0xf0] sm:$0xff]
        %v436 = vld [vmem:[%s370 + $0xf8] sm:$0xff]
        %v437 = vld [vmem:[%s370 + $0x100] sm:$0xff]
        %v438 = vld [vmem:[%s370 + $0x108] sm:$0xff]
        %v439 = vld [vmem:[%s370 + $0x110] sm:$0xff]
        %v440 = vld [vmem:[%s370 + $0x118] sm:$0xff]
        %v441 = vld [vmem:[%s2] sm:$0xff]
        %v442 = vld [vmem:[%s2 + $0x8] sm:$0xff]
        %v443 = vld [vmem:[%s2 + $0x10] sm:$0xff]
        %v444 = vld [vmem:[%s2 + $0x18] sm:$0xff]
        %446 = vset.pattern.permute.xlu0 0
        %447 = vperm.xlu0 %446, %v441
        %v448 = vpop.permute.xlu0 %447
        %451 = vset.pattern.permute.xlu0 0
        %452 = vperm.xlu0 %451, %v442
        %v453 = vpop.permute.xlu0 %452
        %456 = vset.pattern.permute.xlu0 0
        %457 = vperm.xlu0 %456, %v443
        %v458 = vpop.permute.xlu0 %457
        %461 = vset.pattern.permute.xlu0 0
        %462 = vperm.xlu0 %461, %v444
        %v463 = vpop.permute.xlu0 %462
        %v473 = vunpack.c.l.b16 %v397
        %v474 = vunpack.c.h.b16 %v397
        %v475 = vunpack.c.l.b16 %v398
        %v476 = vunpack.c.l.b16 %v399
        %v477 = vunpack.c.h.b16 %v399
        %v478 = vunpack.c.l.b16 %v400
        %v479 = vunpack.c.l.b16 %v401
        %v480 = vunpack.c.h.b16 %v401
        %v481 = vunpack.c.l.b16 %v402
        %v482 = vunpack.c.l.b16 %v403
        %v483 = vunpack.c.h.b16 %v403
        %v484 = vunpack.c.l.b16 %v404
        %v485 = vpack.c.b16 %v476, %v473
        %v486 = vpack.c.b16 %v477, %v474
        %v487 = vpack.c.b16 %v478, %v475
        %v488 = vpack.c.b16 %v482, %v479
        %v489 = vpack.c.b16 %v483, %v480
        %v490 = vpack.c.b16 %v484, %v481
        %v531 = vunpack.c.l.b16 %v405
        %v532 = vunpack.c.h.b16 %v405
        %v533 = vunpack.c.l.b16 %v406
        %v534 = vunpack.c.h.b16 %v406
        %v535 = vunpack.c.l.b16 %v407
        %v536 = vunpack.c.h.b16 %v407
        %v537 = vunpack.c.l.b16 %v408
        %v538 = vunpack.c.h.b16 %v408
        %v539 = vunpack.c.l.b16 %v409
        %v540 = vunpack.c.h.b16 %v409
        %v541 = vunpack.c.l.b16 %v410
        %v542 = vunpack.c.h.b16 %v410
        %v543 = vunpack.c.l.b16 %v411
        %v544 = vunpack.c.h.b16 %v411
        %v545 = vunpack.c.l.b16 %v412
        %v546 = vunpack.c.h.b16 %v412
        %v547 = vunpack.c.l.b16 %v413
        %v548 = vunpack.c.h.b16 %v413
        %v549 = vunpack.c.l.b16 %v414
        %v550 = vunpack.c.h.b16 %v414
        %v551 = vunpack.c.l.b16 %v415
        %v552 = vunpack.c.h.b16 %v415
        %v553 = vunpack.c.l.b16 %v416
        %v554 = vunpack.c.h.b16 %v416
        %v555 = vunpack.c.l.b16 %v417
        %v556 = vunpack.c.h.b16 %v417
        %v557 = vunpack.c.l.b16 %v418
        %v558 = vunpack.c.h.b16 %v418
        %v559 = vunpack.c.l.b16 %v419
        %v560 = vunpack.c.h.b16 %v419
        %v561 = vunpack.c.l.b16 %v420
        %v562 = vunpack.c.h.b16 %v420
        %v563 = vunpack.c.l.b16 %v421
        %v564 = vunpack.c.h.b16 %v421
        %v565 = vunpack.c.l.b16 %v422
        %v566 = vunpack.c.h.b16 %v422
        %v567 = vunpack.c.l.b16 %v423
        %v568 = vunpack.c.h.b16 %v423
        %v569 = vunpack.c.l.b16 %v424
        %v570 = vunpack.c.h.b16 %v424
        %v571 = vunpack.c.l.b16 %v425
        %v572 = vunpack.c.h.b16 %v425
        %v573 = vunpack.c.l.b16 %v426
        %v574 = vunpack.c.h.b16 %v426
        %v575 = vunpack.c.l.b16 %v427
        %v576 = vunpack.c.h.b16 %v427
        %v577 = vunpack.c.l.b16 %v428
        %v578 = vunpack.c.h.b16 %v428
        %v579 = vunpack.c.l.b16 %v429
        %v580 = vunpack.c.h.b16 %v429
        %v581 = vunpack.c.l.b16 %v430
        %v582 = vunpack.c.h.b16 %v430
        %v583 = vunpack.c.l.b16 %v431
        %v584 = vunpack.c.h.b16 %v431
        %v585 = vunpack.c.l.b16 %v432
        %v586 = vunpack.c.h.b16 %v432
        %v587 = vunpack.c.l.b16 %v433
        %v588 = vunpack.c.h.b16 %v433
        %v589 = vunpack.c.l.b16 %v434
        %v590 = vunpack.c.h.b16 %v434
        %v591 = vunpack.c.l.b16 %v435
        %v592 = vunpack.c.h.b16 %v435
        %v593 = vunpack.c.l.b16 %v436
        %v594 = vunpack.c.h.b16 %v436
        %v595 = vunpack.c.l.b16 %v437
        %v596 = vunpack.c.h.b16 %v437
        %v597 = vunpack.c.l.b16 %v438
        %v598 = vunpack.c.h.b16 %v438
        %v599 = vunpack.c.l.b16 %v439
        %v600 = vunpack.c.h.b16 %v439
        %v601 = vunpack.c.l.b16 %v440
        %v602 = vunpack.c.h.b16 %v440
        %v603 = vpack.c.b16 %v533, %v531
        %v604 = vpack.c.b16 %v534, %v532
        %v605 = vpack.c.b16 %v537, %v535
        %v606 = vpack.c.b16 %v538, %v536
        %v607 = vpack.c.b16 %v541, %v539
        %v608 = vpack.c.b16 %v542, %v540
        %v609 = vpack.c.b16 %v545, %v543
        %v610 = vpack.c.b16 %v546, %v544
        %v611 = vpack.c.b16 %v549, %v547
        %v612 = vpack.c.b16 %v550, %v548
        %v613 = vpack.c.b16 %v553, %v551
        %v614 = vpack.c.b16 %v554, %v552
        %v615 = vpack.c.b16 %v557, %v555
        %v616 = vpack.c.b16 %v558, %v556
        %v617 = vpack.c.b16 %v561, %v559
        %v618 = vpack.c.b16 %v562, %v560
        %v619 = vpack.c.b16 %v565, %v563
        %v620 = vpack.c.b16 %v566, %v564
        %v621 = vpack.c.b16 %v569, %v567
        %v622 = vpack.c.b16 %v570, %v568
        %v623 = vpack.c.b16 %v573, %v571
        %v624 = vpack.c.b16 %v574, %v572
        %v625 = vpack.c.b16 %v577, %v575
        %v626 = vpack.c.b16 %v578, %v576
        %v627 = vpack.c.b16 %v581, %v579
        %v628 = vpack.c.b16 %v582, %v580
        %v629 = vpack.c.b16 %v585, %v583
        %v630 = vpack.c.b16 %v586, %v584
        %v631 = vpack.c.b16 %v589, %v587
        %v632 = vpack.c.b16 %v590, %v588
        %v633 = vpack.c.b16 %v593, %v591
        %v634 = vpack.c.b16 %v594, %v592
        %v635 = vpack.c.b16 %v597, %v595
        %v636 = vpack.c.b16 %v598, %v596
        %v637 = vpack.c.b16 %v601, %v599
        %v638 = vpack.c.b16 %v602, %v600
        %vm675 = vcmask 261120
        %v677 = vsel %vm675, %v487, 0
        %v680 = vsel %vm675, %v490, 0
        %682 = vmatprep.subr.bf16.mxu0 %v604
        %683 = vmatpush1.bf16.msra.mxu0 %v603
        %684 = vmatprep.subr.bf16.mxu0 %v606
        %685 = vmatpush1.bf16.msra.mxu0 %v605
        %686 = vmatprep.subr.bf16.mxu0 %v608
        %687 = vmatpush1.bf16.msra.mxu0 %v607
        %688 = vmatprep.subr.bf16.mxu0 %v610
        %689 = vmatpush1.bf16.msra.mxu0 %v609
        %690 = vmatprep.subr.bf16.mxu0 %v612
        %691 = vmatpush1.bf16.msra.mxu0 %v611
        %692 = vmatprep.subr.bf16.mxu0 %v614
        %693 = vmatpush1.bf16.msra.mxu0 %v613
        %694 = vmatprep.subr.bf16.mxu0 %v616
        %695 = vmatpush1.bf16.msra.mxu0 %v615
        %696 = vmatprep.subr.bf16.mxu0 %v618
        %697 = vmatpush1.bf16.msra.mxu0 %v617
        %698 = vmatprep.subr.bf16.mxu0 %v620
        %699 = vmatpush1.bf16.msra.mxu0 %v619
        %700 = vmatprep.subr.bf16.mxu0 %v622
        %701 = vmatpush1.bf16.msra.mxu0 %v621
        %702 = vmatprep.subr.bf16.mxu0 %v624
        %703 = vmatpush1.bf16.msra.mxu0 %v623
        %704 = vmatprep.subr.bf16.mxu0 %v626
        %705 = vmatpush1.bf16.msra.mxu0 %v625
        %706 = vmatprep.subr.bf16.mxu0 %v628
        %707 = vmatpush1.bf16.msra.mxu0 %v627
        %708 = vmatprep.subr.bf16.mxu0 %v630
        %709 = vmatpush1.bf16.msra.mxu0 %v629
        %710 = vmatprep.subr.bf16.mxu0 %v632
        %711 = vmatpush1.bf16.msra.mxu0 %v631
        %712 = vmatprep.subr.bf16.mxu0 %v634
        %713 = vmatpush1.bf16.msra.mxu0 %v633
        %714 = vmatprep.mubr.bf16.mxu0 %v486
        %715 = vmatmul.mubr.bf16.gmra.mrb[0].mxu0 %v485
        %v716 = vpop.f32.mrb[0].mxu0
        %v717 = vadd.f32 %v448, %v716
        %v718 = vpop.f32.mrb[0].mxu0
        %v719 = vadd.f32 %v448, %v718
        %v720 = vpop.f32.mrb[0].mxu0
        %v721 = vadd.f32 %v453, %v720
        %v722 = vpop.f32.mrb[0].mxu0
        %v723 = vadd.f32 %v453, %v722
        %724 = vmatprep.mubr.bf16.mxu0 %v489
        %725 = vmatmul.mubr.bf16.gmra.mrb[0].mxu0 %v488
        %v726 = vpop.f32.mrb[0].mxu0
        %v727 = vadd.f32 %v458, %v726
        %v728 = vpop.f32.mrb[0].mxu0
        %v729 = vadd.f32 %v458, %v728
        %v730 = vpop.f32.mrb[0].mxu0
        %v731 = vadd.f32 %v463, %v730
        %v732 = vpop.f32.mrb[0].mxu0
        %v733 = vadd.f32 %v463, %v732
        %734 = vdwg.mxu0
        %735 = vmatprep.subr.bf16.mxu0 %v636
        %736 = vmatpush1.bf16.msra.mxu0 %v635
        %737 = vmatprep.subr.bf16.mxu0 %v638
        %738 = vmatpush1.bf16.msra.mxu0 %v637
        %739 = vmatprep.subr.bf16.mxu0 0
        %740 = vmatpush1.bf16.msra.mxu0 0
        %741 = vmatprep.subr.bf16.mxu0 0
        %742 = vmatpush1.bf16.msra.mxu0 0
        %743 = vmatprep.subr.bf16.mxu0 0
        %744 = vmatpush1.bf16.msra.mxu0 0
        %745 = vmatprep.subr.bf16.mxu0 0
        %746 = vmatpush1.bf16.msra.mxu0 0
        %747 = vmatprep.subr.bf16.mxu0 0
        %748 = vmatpush1.bf16.msra.mxu0 0
        %749 = vmatprep.subr.bf16.mxu0 0
        %750 = vmatpush1.bf16.msra.mxu0 0
        %751 = vmatprep.subr.bf16.mxu0 0
        %752 = vmatpush1.bf16.msra.mxu0 0
        %753 = vmatprep.subr.bf16.mxu0 0
        %754 = vmatpush1.bf16.msra.mxu0 0
        %755 = vmatprep.subr.bf16.mxu0 0
        %756 = vmatpush1.bf16.msra.mxu0 0
        %757 = vmatprep.subr.bf16.mxu0 0
        %758 = vmatpush1.bf16.msra.mxu0 0
        %759 = vmatprep.subr.bf16.mxu0 0
        %760 = vmatpush1.bf16.msra.mxu0 0
        %761 = vmatprep.subr.bf16.mxu0 0
        %762 = vmatpush1.bf16.msra.mxu0 0
        %763 = vmatprep.subr.bf16.mxu0 0
        %764 = vmatpush1.bf16.msra.mxu0 0
        %765 = vmatprep.subr.bf16.mxu0 0
        %766 = vmatpush1.bf16.msra.mxu0 0
        %767 = vmatprep.mubr.bf16.mxu0 0
        %768 = vmatmul.mubr.bf16.gmra.mrb[0].mxu0 %v677
        %v769 = vpop.f32.mrb[0].mxu0
        %v770 = vadd.f32 %v717, %v769
        %v771 = vpop.f32.mrb[0].mxu0
        %v772 = vadd.f32 %v719, %v771
        %v773 = vpop.f32.mrb[0].mxu0
        %v774 = vadd.f32 %v721, %v773
        %v775 = vpop.f32.mrb[0].mxu0
        %v776 = vadd.f32 %v723, %v775
        %777 = vmatprep.mubr.bf16.mxu0 0
        %778 = vmatmul.mubr.bf16.gmra.mrb[0].mxu0 %v680
        %v779 = vpop.f32.mrb[0].mxu0
        %v780 = vadd.f32 %v727, %v779
        %v781 = vpop.f32.mrb[0].mxu0
        %v782 = vadd.f32 %v729, %v781
        %v783 = vpop.f32.mrb[0].mxu0
        %v784 = vadd.f32 %v731, %v783
        %v785 = vpop.f32.mrb[0].mxu0
        %v786 = vadd.f32 %v733, %v785
        %787 = vdwg.mxu0
        %v788 = vmax.f32 %v770, 0.0
        %v789 = vmax.f32 %v772, 0.0
        %v790 = vmax.f32 %v774, 0.0
        %v791 = vmax.f32 %v776, 0.0
        %v792 = vmax.f32 %v780, 0.0
        %v793 = vmax.f32 %v782, 0.0
        %v794 = vmax.f32 %v784, 0.0
        %v795 = vmax.f32 %v786, 0.0
        %v796 = vld [vmem:[%s3] sm:$0xf]
        %v797 = vld [vmem:[%s3 + $0x4] sm:$0xf]
        %v798 = vpack.c.bf16 %v790, %v788
        %v799 = vpack.c.bf16 %v791, %v789
        %v800 = vpack.c.bf16 %v794, %v792
        %v801 = vpack.c.bf16 %v795, %v793
        %v802 = vld [vmem:[%s4] sm:$0xff]
        %v803 = vld [vmem:[%s4 + $0x8] sm:$0xff]
        %805 = vset.pattern.permute.xlu0 0
        %806 = vperm.xlu0 %805, %v802
        %v807 = vpop.permute.xlu0 %806
        %810 = vset.pattern.permute.xlu0 0
        %811 = vperm.xlu0 %810, %v803
        %v812 = vpop.permute.xlu0 %811
        %v816 = vunpack.c.l.b16 %v796
        %v817 = vunpack.c.l.b16 %v797
        %v818 = vpack.c.b16 %v817, %v816
        %v820 = vsel %vm675, %v818, 0
        %822 = vmatprep.subr.bf16.mxu0 %v799
        %823 = vmatpush1.bf16.msra.mxu0 %v798
        %824 = vmatprep.subr.bf16.mxu0 %v801
        %825 = vmatpush1.bf16.msra.mxu0 %v800
        %826 = vmatprep.subr.bf16.mxu0 0
        %827 = vmatpush1.bf16.msra.mxu0 0
        %828 = vmatprep.subr.bf16.mxu0 0
        %829 = vmatpush1.bf16.msra.mxu0 0
        %830 = vmatprep.subr.bf16.mxu0 0
        %831 = vmatpush1.bf16.msra.mxu0 0
        %832 = vmatprep.subr.bf16.mxu0 0
        %833 = vmatpush1.bf16.msra.mxu0 0
        %834 = vmatprep.subr.bf16.mxu0 0
        %835 = vmatpush1.bf16.msra.mxu0 0
        %836 = vmatprep.subr.bf16.mxu0 0
        %837 = vmatpush1.bf16.msra.mxu0 0
        %838 = vmatprep.subr.bf16.mxu0 0
        %839 = vmatpush1.bf16.msra.mxu0 0
        %840 = vmatprep.subr.bf16.mxu0 0
        %841 = vmatpush1.bf16.msra.mxu0 0
        %842 = vmatprep.subr.bf16.mxu0 0
        %843 = vmatpush1.bf16.msra.mxu0 0
        %844 = vmatprep.subr.bf16.mxu0 0
        %845 = vmatpush1.bf16.msra.mxu0 0
        %846 = vmatprep.subr.bf16.mxu0 0
        %847 = vmatpush1.bf16.msra.mxu0 0
        %848 = vmatprep.subr.bf16.mxu0 0
        %849 = vmatpush1.bf16.msra.mxu0 0
        %850 = vmatprep.subr.bf16.mxu0 0
        %851 = vmatpush1.bf16.msra.mxu0 0
        %852 = vmatprep.subr.bf16.mxu0 0
        %853 = vmatpush1.bf16.msra.mxu0 0
        %854 = vmatprep.mubr.bf16.mxu0 0
        %855 = vmatmul.mubr.bf16.gmra.mrb[0].mxu0 %v820
        %v856 = vpop.f32.mrb[0].mxu0
        %v857 = vadd.f32 %v807, %v856
        %v858 = vpop.f32.mrb[0].mxu0
        %v859 = vadd.f32 %v807, %v858
        %v860 = vpop.f32.mrb[0].mxu0
        %v861 = vadd.f32 %v812, %v860
        %v862 = vpop.f32.mrb[0].mxu0
        %v863 = vadd.f32 %v812, %v862
        %864 = vdwg.mxu0
        %865 = vst [vmem:[%s393] sm:$0xff] %v857
        %866 = vst [vmem:[%s393 + $0x8] sm:$0xff] %v859
        %867 = vst [vmem:[%s393 + $0x10] sm:$0xff] %v861
        %868 = vst [vmem:[%s393 + $0x18] sm:$0xff] %v863
        %s869 = sand.u32 %s134, 1
        %s870 = sand.u32 %s134, 1
        %s871 = smul.addr %s870, 32
        %s872 = scalar_lea.vmem [#allocation3], %s871
        // Predicated region
        $region79: #{pose_resnet_forward.3} parent=73 // pred_check
          %p873 = pneg %p144
        $region80: #{pose_resnet_forward.3} parent=73 // pred_check_branch
          %875 = sbr.rel (%p873) target = $region82
        $region81: #{pose_resnet_forward.3} parent=73 // pred_region
          %s876 = smul.u32 2, %s16
          %s877 = smul.addr %s876, 8
          %s878 = scalar_lea.vmem %s5, %s877
          // Predicated region
          $region83: #{pose_resnet_forward.3} parent=81 // pred_check
            _
          $region84: #{pose_resnet_forward.3} parent=81 // pred_check_branch
            %880 = sbr.rel (0) target = $region86
          $region85: #{pose_resnet_forward.3} parent=81 // pred_region
            // Predicated region
            $region87: #{pose_resnet_forward.3} parent=85 // pred_check
              _
            $region88: #{pose_resnet_forward.3} parent=85 // pred_check_branch
              %882 = sbr.rel (0) target = $region90
            $region89: #{pose_resnet_forward.3} parent=85 // pred_region
              loop: start=0, step=1, limit=1
              $region91: #{pose_resnet_forward.3} parent=89 // loop_pre_header
                _
              $region92: #{pose_resnet_forward.3} parent=89 // loop_header
                %s884 = sphi 0, %s888
                %p885 = scmp.ge.s32.totalorder %s884, 1
                %s889 = sphi %s872, %s872
                %s890 = sphi %s878, %s878
              $region93: #{pose_resnet_forward.3} parent=89 // loop_header_branch
                %887 = sbr.rel (%p885) target = $region97
              $region94: #{pose_resnet_forward.3} parent=89 // loop_body
                %v891 = vld [vmem:[%s889] sm:$0xff]
                %892 = vst [vmem:[%s890] sm:$0xff] %v891
                %v893 = vld [vmem:[%s889 + $0x8] sm:$0xff]
                %894 = vst [vmem:[%s890 + $0x8] sm:$0xff] %v893
                %v895 = vld [vmem:[%s889 + $0x10] sm:$0xff]
                %896 = vst [vmem:[%s890 + $0x20] sm:$0xff] %v895
                %v897 = vld [vmem:[%s889 + $0x18] sm:$0xff]
                %898 = vst [vmem:[%s890 + $0x28] sm:$0xff] %v897
              $region95: #{pose_resnet_forward.3} parent=89 // loop_footer
                %s888 = sadd.s32 1, %s884
              $region96: #{pose_resnet_forward.3} parent=89 // loop_footer_branch
                %883 = sbr.rel target = $region92
              $region97: #{pose_resnet_forward.3} parent=89 // loop_exit
                _
            $region90: #{pose_resnet_forward.3} parent=85 // pred_fallthru
              _
            // Predicated region
            $region98: #{pose_resnet_forward.3} parent=85 // pred_check
              _
            $region99: #{pose_resnet_forward.3} parent=85 // pred_check_branch
              %900 = sbr.rel target = $region101
            $region100: #{pose_resnet_forward.3} parent=85 // pred_region
              _
            $region101: #{pose_resnet_forward.3} parent=85 // pred_fallthru
              _
          $region86: #{pose_resnet_forward.3} parent=81 // pred_fallthru
            _
          %901 = vnop
        $region82: #{pose_resnet_forward.3} parent=73 // pred_fallthru
          _
      $region74: #{pose_resnet_forward.3} parent=5 // pred_fallthru
        _
      %p902 = scmp.le.s32.totalorder 2, %s11
      // Predicated region
      $region102: #{pose_resnet_forward.3} parent=5 // pred_check
        %p903 = pneg %p902
      $region103: #{pose_resnet_forward.3} parent=5 // pred_check_branch
        %905 = sbr.rel (%p903) target = $region105
      $region104: #{pose_resnet_forward.3} parent=5 // pred_region
        %s906 = ssub.s32 %s11, 2
        // Predicated region
        $region106: #{pose_resnet_forward.3} parent=104 // pred_check
          %p907 = pneg %p150
        $region107: #{pose_resnet_forward.3} parent=104 // pred_check_branch
          %909 = sbr.rel (%p907) target = $region109
        $region108: #{pose_resnet_forward.3} parent=104 // pred_region
          %s910 = sand.u32 %s135, 1
          %s911 = sand.u32 %s135, 1
          %s912 = smul.addr %s911, 32
          %s913 = scalar_lea.vmem [#allocation3], %s912
        $region109: #{pose_resnet_forward.3} parent=104 // pred_fallthru
          _
      $region105: #{pose_resnet_forward.3} parent=5 // pred_fallthru
        _
    $region6: #{pose_resnet_forward.3} parent=1 // loop_footer
      %s15 = sadd.s32 1, %s11
    $region7: #{pose_resnet_forward.3} parent=1 // loop_footer_branch
      %10 = sbr.rel target = $region3
    $region8: #{pose_resnet_forward.3} parent=1 // loop_exit
      _

</llo_original>
